<compile_context>
chip_gen: v7x
topology: tpu7x:2x2x1
jax: 0.10.0
libtpu: 0.0.40
codegen_flags: <defaults>
</compile_context>

<pallas_src>
import functools

import jax
import jax.numpy as jnp
from jax.experimental import pallas as pl
from jax.experimental.pallas import tpu as pltpu


def _kldiv_block_kernel(logits_ref, targets_ref, partial_ref, *,
                        inv_t, tile_n, n_rows):
    z = logits_ref[...].astype(jnp.float32)
    t = targets_ref[...].astype(jnp.float32)
    if inv_t != 1.0:
        # Fold 1/T at trace time (multiply, not divide); skipped when T == 1
        # to save two full-block VPU multiplies per element.
        z = z * inv_t
        t = t * inv_t

    # Numerically stable shifted logits / log-sum-exp (lane-axis reductions).
    z_shift = z - jnp.max(z, axis=1, keepdims=True)
    z_lse = jnp.log(jnp.sum(jnp.exp(z_shift), axis=1, keepdims=True))

    # TODO(synk): if a v6e/v7x profile shows the EUP slot saturating, compute
    # these exps in bf16 and cast back before the lane sums (keep f32 on v5e).
    t_shift = t - jnp.max(t, axis=1, keepdims=True)
    t_exp = jnp.exp(t_shift)
    t_sum = jnp.sum(t_exp, axis=1, keepdims=True)

    # Fused per-row KL(p || q); p > 0 always (softmax) so no 0*log(0) case.
    #   sum_c p*(log_p - log_q)
    # = (sum_c t_exp*(t_shift - z_shift)) / t_sum - log(t_sum) + z_lse
    weighted = jnp.sum(t_exp * (t_shift - z_shift), axis=1, keepdims=True)
    # NOTE: this reciprocal is one op per *row* (amortized over C columns), so
    # the exact form is kept to preserve the 1e-5 validation; approx=True buys
    # nothing measurable here.
    row_kl = weighted * pl.reciprocal(t_sum) - jnp.log(t_sum) + z_lse

    if n_rows % tile_n != 0:
        # Tail block: mask out-of-range rows on the cheap (tile_n, 1) per-row
        # result rather than select-zeroing the two full (tile_n, C) inputs.
        # Every reduction above is per-row (axis=1, keepdims), so garbage
        # (even NaN/Inf) in the padded rows cannot contaminate valid rows, and
        # jnp.where selects exactly 0.0 for them.
        row = (pl.program_id(0) * tile_n
               + jax.lax.broadcasted_iota(jnp.int32, (tile_n, 1), 0))
        row_kl = jnp.where(row < n_rows, row_kl, 0.0)

    # One partial per grid step, splatted across a full (8, 128) vreg so the
    # writeback is an unmasked, (8,128)-aligned store.
    block_sum = jnp.sum(row_kl, axis=0, keepdims=True)          # (1, 1)
    partial_ref[...] = jnp.broadcast_to(block_sum.reshape(1, 1, 1),
                                        partial_ref.shape)


def _vmem_limit_bytes():
    """Generation-aware scoped-VMEM budget: 48 MiB on v5e/v6e, 32 MiB on v7x."""
    default_cap = 128 * 1024 * 1024
    try:
        cap = int(getattr(pltpu.get_tpu_info(), "vmem_capacity_bytes",
                          default_cap))
    except Exception:
        cap = default_cap
    return int(min(48 * 1024 * 1024, cap // 2))


def _choose_tile_n(n_rows, n_cols, itemsize, vmem_limit):
    """Row tile sized by the in-kernel *f32* working set (~1-2 MiB per input).

    Footprint at peak (per step): 2 inputs x 2 pipeline buffers of the raw
    dtype plus ~5 live full-size f32 temporaries (z/t upcasts, z_shift,
    t_shift, t_exp, exp(z_shift)); /24 of the scoped budget keeps generous
    headroom for compiler scratch on every generation.
    """
    target_bytes = min(2 << 20, vmem_limit // 24)
    row_bytes_f32 = n_cols * 4              # footprint math in f32 even for bf16
    align = 16 if itemsize == 2 else 8      # clean bf16 sublane packing
    rows = (target_bytes // max(1, row_bytes_f32)) // align * align
    rows = max(int(rows), align)
    if rows < n_rows:
        return rows
    # Block would cover every row.  Prefer >=2 blocks so v7x's two TensorCores
    # can split the 'parallel' row grid, provided each half still moves a
    # meaningful (>= ~0.5 MiB) amount of input per step.
    half = ((pl.cdiv(n_rows, 2) + align - 1) // align) * align
    if half < n_rows and half * n_cols * itemsize >= (512 << 10):
        return half
    # Single block covering all rows (block == full array dim is allowed even
    # when n_rows is not a multiple of 8); no tail masking needed.
    return n_rows


def kldiv_pallas(logits, targets, T=1.0, reduction="batchmean", *, tile_n=None):
    assert logits.shape == targets.shape and logits.ndim == 2
    n, c = logits.shape
    if reduction not in ("batchmean", "sum", "mean"):
        # TODO(synk): reduction='none' (elementwise output) not implemented.
        raise NotImplementedError(f"unsupported reduction: {reduction!r}")
    # TODO(synk): for vocab sizes where even a 16-row f32 block exceeds the
    # VMEM budget (C >~ 100k), also tile the class axis with an online
    # logsumexp; the current version assumes a full-C block fits.

    vmem_limit = _vmem_limit_bytes()
    itemsize = jnp.dtype(logits.dtype).itemsize
    if tile_n is None:
        tile_n = _choose_tile_n(n, c, itemsize, vmem_limit)
    num_blocks = pl.cdiv(n, tile_n)

    kernel = functools.partial(
        _kldiv_block_kernel, inv_t=1.0 / float(T), tile_n=tile_n, n_rows=n)

    # TODO(synk): if a v5e profile shows exposed DMA at step boundaries, add
    # pipeline_mode=pl.Buffered(3) on the two input BlockSpecs (the shrunken
    # tiles leave VMEM headroom for a third buffer).
    partials = pl.pallas_call(
        kernel,
        out_shape=jax.ShapeDtypeStruct((num_blocks, 8, 128), jnp.float32),
        grid=(num_blocks,),
        in_specs=[
            pl.BlockSpec((tile_n, c), lambda i: (i, 0)),
            pl.BlockSpec((tile_n, c), lambda i: (i, 0)),
        ],
        out_specs=pl.BlockSpec((1, 8, 128), lambda i: (i, 0, 0)),
        compiler_params=pltpu.CompilerParams(
            dimension_semantics=("parallel",),
            vmem_limit_bytes=vmem_limit,
        ),
    )(logits, targets)

    # Final reduction + scaling done exactly once, in the wrapper.
    total = jnp.sum(partials[:, 0, 0])
    scale = float(T) * float(T)
    if reduction == "batchmean":
        scale /= n
    elif reduction == "mean":
        scale /= n * c
    return total * scale


def kldiv_ref(logits, targets, T=1.0, reduction="batchmean"):
    # Pure-JAX reference (log_softmax for log_p avoids 0*log(0) NaNs).
    log_q = jax.nn.log_softmax(logits.astype(jnp.float32) / T, axis=1)
    log_p = jax.nn.log_softmax(targets.astype(jnp.float32) / T, axis=1)
    p = jnp.exp(log_p)
    total = jnp.sum(p * (log_p - log_q))
    if reduction == "batchmean":
        total = total / logits.shape[0]
    elif reduction == "mean":
        total = total / logits.size
    return total * (T * T)


if __name__ == "__main__":
    key = jax.random.PRNGKey(0)
    k1, k2, k3, k4 = jax.random.split(key, 4)

    # Case 1: module defaults (T=1.0, reduction='batchmean'), single block,
    # T==1 multiply folded away.
    batch, num_classes = 8, 32
    logits = jax.random.normal(k1, (batch, num_classes), jnp.float32) * 3.0
    targets = jax.random.normal(k2, (batch, num_classes), jnp.float32) * 3.0
    out = jax.block_until_ready(kldiv_pallas(logits, targets, T=1.0))
    ref = kldiv_ref(logits, targets, T=1.0)
    assert jnp.allclose(out, ref, rtol=1e-5, atol=1e-5), (out, ref)

    # Case 2: module-level temperature (T=20.0) on a shape exercising the row
    # grid and tail-row masking (batch 20 with an 8-row tile -> 3 blocks).
    batch2, num_classes2 = 20, 128
    logits2 = jax.random.normal(k3, (batch2, num_classes2), jnp.float32) * 3.0
    targets2 = jax.random.normal(k4, (batch2, num_classes2), jnp.float32) * 3.0
    out2 = jax.block_until_ready(
        kldiv_pallas(logits2, targets2, T=20.0, tile_n=8))
    ref2 = kldiv_ref(logits2, targets2, T=20.0)
    assert jnp.allclose(out2, ref2, rtol=1e-5, atol=1e-5), (out2, ref2)

    # Case 3: bf16 inputs (half the HBM traffic), 16-row tile (bf16 sublane
    # packing) with a tail block (20 % 16 != 0 -> 2 blocks).
    logits3 = logits2.astype(jnp.bfloat16)
    targets3 = targets2.astype(jnp.bfloat16)
    out3 = jax.block_until_ready(
        kldiv_pallas(logits3, targets3, T=20.0, tile_n=16))
    ref3 = kldiv_ref(logits3, targets3, T=20.0)
    assert jnp.allclose(out3, ref3, rtol=1e-4, atol=1e-5), (out3, ref3)

    print("KERNEL_OK")
</pallas_src>

<mosaic_0001>
module attributes {stable_mosaic.version = 11 : i64} {
  func.func @_kldiv_block_kernel(%arg0: i32, %arg1: memref<8x32xf32, #tpu.memory_space<vmem>>, %arg2: memref<8x32xf32, #tpu.memory_space<vmem>>, %arg3: memref<1x8x128xf32, #tpu.memory_space<vmem>>) attributes {dimension_semantics = [#tpu.dimension_semantics<parallel>], iteration_bounds = array<i64: 1>, scalar_prefetch = 0 : i64, scratch_operands = 0 : i64, tpu.core_type = #tpu.core_type<tc>, window_params = [{transform_indices = @transform_0, window_bounds = array<i64: 8, 32>}, {transform_indices = @transform_1, window_bounds = array<i64: 8, 32>}, {transform_indices = @transform_2, window_bounds = array<i64: 1, 8, 128>}]} {
    %c0 = arith.constant 0 : index
    %c0_0 = arith.constant 0 : index
    %0 = vector.load %arg1[%c0, %c0_0] : memref<8x32xf32, #tpu.memory_space<vmem>>, vector<8x32xf32>
    %c0_1 = arith.constant 0 : index
    %c0_2 = arith.constant 0 : index
    %1 = vector.load %arg2[%c0_1, %c0_2] : memref<8x32xf32, #tpu.memory_space<vmem>>, vector<8x32xf32>
    %cst = arith.constant dense<0xFF800000> : vector<8xf32>
    %2 = vector.multi_reduction <maximumf>, %0, %cst [1] : vector<8x32xf32> to vector<8xf32>
    %3 = vector.shape_cast %2 : vector<8xf32> to vector<8x1xf32>
    %4 = vector.broadcast %3 : vector<8x1xf32> to vector<8x32xf32>
    %5 = arith.subf %0, %4 : vector<8x32xf32>
    %6 = math.exp %5 : vector<8x32xf32>
    %cst_3 = arith.constant dense<0.000000e+00> : vector<8xf32>
    %7 = vector.multi_reduction <add>, %6, %cst_3 [1] : vector<8x32xf32> to vector<8xf32>
    %8 = vector.shape_cast %7 : vector<8xf32> to vector<8x1xf32>
    %9 = math.log %8 : vector<8x1xf32>
    %cst_4 = arith.constant dense<0xFF800000> : vector<8xf32>
    %10 = vector.multi_reduction <maximumf>, %1, %cst_4 [1] : vector<8x32xf32> to vector<8xf32>
    %11 = vector.shape_cast %10 : vector<8xf32> to vector<8x1xf32>
    %12 = vector.broadcast %11 : vector<8x1xf32> to vector<8x32xf32>
    %13 = arith.subf %1, %12 : vector<8x32xf32>
    %14 = math.exp %13 : vector<8x32xf32>
    %cst_5 = arith.constant dense<0.000000e+00> : vector<8xf32>
    %15 = vector.multi_reduction <add>, %14, %cst_5 [1] : vector<8x32xf32> to vector<8xf32>
    %16 = vector.shape_cast %15 : vector<8xf32> to vector<8x1xf32>
    %17 = arith.subf %13, %5 : vector<8x32xf32>
    %18 = arith.mulf %14, %17 : vector<8x32xf32>
    %cst_6 = arith.constant dense<0.000000e+00> : vector<8xf32>
    %19 = vector.multi_reduction <add>, %18, %cst_6 [1] : vector<8x32xf32> to vector<8xf32>
    %20 = vector.shape_cast %19 : vector<8xf32> to vector<8x1xf32>
    %21 = tpu.reciprocal %16 : vector<8x1xf32> -> vector<8x1xf32>
    %22 = arith.mulf %20, %21 : vector<8x1xf32>
    %23 = math.log %16 : vector<8x1xf32>
    %24 = arith.subf %22, %23 : vector<8x1xf32>
    %25 = arith.addf %24, %9 : vector<8x1xf32>
    %cst_7 = arith.constant dense<0.000000e+00> : vector<1xf32>
    %26 = vector.multi_reduction <add>, %25, %cst_7 [0] : vector<8x1xf32> to vector<1xf32>
    %27 = vector.shape_cast %26 : vector<1xf32> to vector<1x1xf32>
    %28 = vector.shape_cast %27 : vector<1x1xf32> to vector<1x1x1xf32>
    %29 = vector.shape_cast %28 : vector<1x1x1xf32> to vector<1x1x1xf32>
    %30 = vector.broadcast %29 : vector<1x1x1xf32> to vector<1x8x128xf32>
    %c0_8 = arith.constant 0 : index
    %c0_9 = arith.constant 0 : index
    %c0_10 = arith.constant 0 : index
    %31 = vector.load %arg3[%c0_8, %c0_9, %c0_10] : memref<1x8x128xf32, #tpu.memory_space<vmem>>, vector<1x8x128xf32>
    tpu.vector_store %arg3[%c0_8, %c0_9, %c0_10], %30 {strides = array<i32>} : memref<1x8x128xf32, #tpu.memory_space<vmem>>, vector<1x8x128xf32>,
    return
  }
  func.func @transform_0(%arg0: i32) -> (i32, i32) {
    %c0_i32 = arith.constant 0 : i32
    %c0_i32_0 = arith.constant 0 : i32
    return %arg0, %c0_i32 : i32, i32
  }
  func.func @transform_1(%arg0: i32) -> (i32, i32) {
    %c0_i32 = arith.constant 0 : i32
    %c0_i32_0 = arith.constant 0 : i32
    return %arg0, %c0_i32 : i32, i32
  }
  func.func @transform_2(%arg0: i32) -> (i32, i32, i32) {
    %c0_i32 = arith.constant 0 : i32
    %c0_i32_0 = arith.constant 0 : i32
    %c0_i32_1 = arith.constant 0 : i32
    return %arg0, %c0_i32, %c0_i32_0 : i32, i32, i32
  }
}

</mosaic_0001>

<llo_original>
// kernel: tpu_custom_call.1
$region0: #{tpu_custom_call.1}
  #allocation0 [shape = 'u32[]', space=smem, size = 0x4, offset = 0x4, fixed_abs, tag = 'smem constant byte address 0x4 - core index']
  #allocation1 [shape = 'u32[144,128]{1,0:T(1,128)}', space=vmem, size = 0x12000, scoped, tag = 'internal scratch']
  %s0 = inlined_call_operand.hbm [shape: f32[8,32], index: 0, kind: input, shape index: {}]
  %s1 = inlined_call_operand.hbm [shape: f32[8,32], index: 1, kind: input, shape index: {}]
  %s2 = inlined_call_operand.hbm [shape: f32[1,8,128], index: 2, kind: output, shape index: {}]
  %s3 = sld [smem:[#allocation0]]
  $region26: #{tpu_custom_call.1} parent=0
    _
  %s5 = ssub.s32 1, %s3
  %s6 = scalar_select 0, %s5, %s3
  $region1: #{tpu_custom_call.1} parent=0
    #allocation2 [shape = 'u8[4096]{0}', space=vmem, size = 0x1000, scoped, tag = 'input window, operand 0, single buffered']
    #allocation3 [shape = 's32[1]{0}', space=sflag, size = 0x4, scoped, tag = 'scoped memory for tpu_custom_call.1']
    #allocation4 [shape = 's32[1]{0}', space=sflag, size = 0x4, scoped, tag = 'scoped memory for tpu_custom_call.1']
    #allocation5 [shape = 'u8[4096]{0}', space=vmem, size = 0x1000, scoped, tag = 'input window, operand 1, single buffered']
    #allocation6 [shape = 's32[1]{0}', space=sflag, size = 0x4, scoped, tag = 'scoped memory for tpu_custom_call.1']
    #allocation7 [shape = 'u8[4096]{0}', space=vmem, size = 0x1000, scoped, tag = 'output window, operand 0, single buffered']
    %7 = vsyncpa [#allocation3], 0
    %8 = vsyncpa [#allocation6], 0
    %9 = vsyncpa [#allocation4], 0
    // Predicated region
    $region2: #{tpu_custom_call.1} parent=1 // pred_check
      _
    $region3: #{tpu_custom_call.1} parent=1 // pred_check_branch
      %11 = sbr.rel (0) target = $region5
    $region4: #{tpu_custom_call.1} parent=1 // pred_region
      %s13 = ssub.s32 128, 128
      %14 = vsyncadd [#allocation3], %s13
      %s16 = sshll.u32 [#allocation2], 4
      %s17 = int_to_ptr.vmem [resolvable:$true] %s16
      %19 = dma.hbm_to_vmem [thread:$0]  %s0, 128, %s17, [#allocation3]
    $region5: #{tpu_custom_call.1} parent=1 // pred_fallthru
      _
    // Predicated region
    $region6: #{tpu_custom_call.1} parent=1 // pred_check
      _
    $region7: #{tpu_custom_call.1} parent=1 // pred_check_branch
      %21 = sbr.rel (0) target = $region9
    $region8: #{tpu_custom_call.1} parent=1 // pred_region
      %s23 = ssub.s32 128, 128
      %24 = vsyncadd [#allocation6], %s23
      %s26 = sshll.u32 [#allocation5], 4
      %s27 = int_to_ptr.vmem [resolvable:$true] %s26
      %29 = dma.hbm_to_vmem [thread:$0]  %s1, 128, %s27, [#allocation6]
    $region9: #{tpu_custom_call.1} parent=1 // pred_fallthru
      _
    // Predicated region
    $region10: #{tpu_custom_call.1} parent=1 // pred_check
      _
    $region11: #{tpu_custom_call.1} parent=1 // pred_check_branch
      %31 = sbr.rel (0) target = $region13
    $region12: #{tpu_custom_call.1} parent=1 // pred_region
      %32 = dma.done [#allocation3], 128
    $region13: #{tpu_custom_call.1} parent=1 // pred_fallthru
      _
    // Predicated region
    $region14: #{tpu_custom_call.1} parent=1 // pred_check
      _
    $region15: #{tpu_custom_call.1} parent=1 // pred_check_branch
      %34 = sbr.rel (0) target = $region17
    $region16: #{tpu_custom_call.1} parent=1 // pred_region
      %35 = dma.done [#allocation6], 128
    $region17: #{tpu_custom_call.1} parent=1 // pred_fallthru
      _
    %v36 = vld [vmem:[#allocation2] sm:$0xff]
    %v37 = vld [vmem:[#allocation5] sm:$0xff]
    %vm38 = vcmask 261120
    %v39 = vsel %vm38, %v36, -inf
    %40 = vmax.xlane.f32.xlu0 %v39
    %v41 = vpop.xlane.xlu0 %40
    %v42 = vsub.f32 %v36, %v41
    %v43 = vmul.f32 %v42, 1.442695
    %v44 = vpow.pop %v43
    %v45 = vsel %vm38, %v44, 0.0
    %46 = vadd.xlane.f32.xlu0 %v45
    %v47 = vpop.xlane.xlu0 %46
    %v48 = vlog2.pop %v47
    %v49 = vmul.f32 %v48, 0.6931472
    %v50 = vsel %vm38, %v37, -inf
    %51 = vmax.xlane.f32.xlu0 %v50
    %v52 = vpop.xlane.xlu0 %51
    %v53 = vsub.f32 %v37, %v52
    %v54 = vmul.f32 %v53, 1.442695
    %v55 = vpow.pop %v54
    %v56 = vsel %vm38, %v55, 0.0
    %57 = vadd.xlane.f32.xlu0 %v56
    %v58 = vpop.xlane.xlu0 %57
    %v59 = vsub.f32 %v53, %v42
    %v60 = vmul.f32 %v55, %v59
    %v61 = vsel %vm38, %v60, 0.0
    %62 = vadd.xlane.f32.xlu0 %v61
    %v63 = vpop.xlane.xlu0 %62
    %v64 = vrcp.pop %v58
    %v65 = vmul.f32 %v63, %v64
    %v66 = vlog2.pop %v58
    %v67 = vmul.f32 %v66, 0.6931472
    %v68 = vsub.f32 %v65, %v67
    %v69 = vadd.f32 %v68, %v49
    %v70 = vrot.slane %v69, 4
    %v71 = vadd.f32 %v69, %v70
    %v72 = vrot.slane %v71, 2
    %v73 = vadd.f32 %v71, %v72
    %v74 = vrot.slane %v73, 1
    %v75 = vadd.f32 %v73, %v74
    %76 = vst [vmem:[#allocation7] sm:$0xff] %v75
    // Predicated region
    $region18: #{tpu_custom_call.1} parent=1 // pred_check
      _
    $region19: #{tpu_custom_call.1} parent=1 // pred_check_branch
      %78 = sbr.rel (0) target = $region21
    $region20: #{tpu_custom_call.1} parent=1 // pred_region
      %s80 = ssub.s32 128, 128
      %81 = vsyncadd [#allocation4], %s80
      %s83 = sshll.u32 [#allocation7], 4
      %s84 = int_to_ptr.vmem [resolvable:$true] %s83
      %86 = dma.vmem_to_hbm [thread:$0]  %s84, 128, %s2, [#allocation4]
    $region21: #{tpu_custom_call.1} parent=1 // pred_fallthru
      _
    // Predicated region
    $region22: #{tpu_custom_call.1} parent=1 // pred_check
      _
    $region23: #{tpu_custom_call.1} parent=1 // pred_check_branch
      %88 = sbr.rel (0) target = $region25
    $region24: #{tpu_custom_call.1} parent=1 // pred_region
      %89 = dma.done [#allocation4], 128
    $region25: #{tpu_custom_call.1} parent=1 // pred_fallthru
      _
    %90 = vsyncpa [#allocation3], 1
    %91 = vsyncpa [#allocation6], 1
    %92 = vsyncpa [#allocation4], 1

</llo_original>
